<compile_context>
chip_gen: v7x
topology: tpu7x:2x2x1
jax: 0.10.0
libtpu: 0.0.40
codegen_flags: <defaults>
</compile_context>

<pallas_src>
import functools

import jax
import jax.numpy as jnp
from jax.experimental import pallas as pl
from jax.experimental.pallas import tpu as pltpu

BASIS = 122400.0
LANE = 128
MAX_TILE_ROWS = 2048  # 2048 * 128 * 4 B = 1 MiB per input per block


def _cape_partial_kernel(x_ref, y_ref, o_ref, *, tile_rows, total_rows, needs_mask):
    x = x_ref[...]
    y = y_ref[...]
    # Only cast when needed (skip redundant VPU casts for f32 inputs).
    if x.dtype != jnp.float32:
        x = x.astype(jnp.float32)
    if y.dtype != jnp.float32:
        y = y.astype(jnp.float32)
    diff = jnp.abs(x - y)
    if needs_mask:
        # Mask rows past the end of the array (last, partially-filled tile):
        # padded block data is unspecified, so mask BEFORE the reduction.
        i = pl.program_id(0)
        row_ids = i * tile_rows + jax.lax.broadcasted_iota(
            jnp.int32, (tile_rows, LANE), 0)
        diff = jnp.where(row_ids < total_rows, diff, 0.0)
    # Lane-dense per-block partial sum (sublane reduce only; XLU slot has slack
    # in this HBM-bound kernel).
    o_ref[...] = jnp.sum(diff, axis=0, keepdims=True)


def cape_loss(inp, tgt):
    assert inp.shape == tgt.shape
    batch = inp.shape[0]                      # len(input) in PyTorch
    n_elem = inp.size
    inv_denom = 1.0 / (batch * BASIS)

    x1 = inp.reshape(-1)
    y1 = tgt.reshape(-1)

    rows = n_elem // LANE
    n_main = rows * LANE

    # Handle a <128-element tail (if any) with a tiny jnp reduction instead of
    # padding/copying the full arrays in HBM.
    has_tail = n_main != n_elem
    if has_tail:
        tail_sum = jnp.sum(
            jnp.abs(x1[n_main:].astype(jnp.float32)
                    - y1[n_main:].astype(jnp.float32)))
        x1 = x1[:n_main]
        y1 = y1[:n_main]

    if rows == 0:
        # Degenerate tiny input: everything lives in the tail.
        return tail_sum * inv_denom

    x2 = x1.reshape(rows, LANE)   # metadata-only reshape of a contiguous array
    y2 = y1.reshape(rows, LANE)

    tile_rows = min(MAX_TILE_ROWS, rows)       # full dim if small (bypasses 8-div rule)
    num_blocks = pl.cdiv(rows, tile_rows)
    needs_mask = (rows % tile_rows) != 0       # only mask when last tile is partial

    kernel = functools.partial(
        _cape_partial_kernel,
        tile_rows=tile_rows,
        total_rows=rows,
        needs_mask=needs_mask,
    )

    partials = pl.pallas_call(
        kernel,
        out_shape=jax.ShapeDtypeStruct((num_blocks, LANE), jnp.float32),
        grid_spec=pltpu.PrefetchScalarGridSpec(
            num_scalar_prefetch=0,
            grid=(num_blocks,),
            in_specs=[
                pl.BlockSpec((tile_rows, LANE), lambda i: (i, 0)),
                pl.BlockSpec((tile_rows, LANE), lambda i: (i, 0)),
            ],
            out_specs=pl.BlockSpec((1, LANE), lambda i: (i, 0)),
        ),
        compiler_params=pltpu.CompilerParams(
            # Independent per-block partials -> parallel grid axis
            # (engages both TensorCores on v7x; neutral on v5e/v6e).
            dimension_semantics=("parallel",),
            # 2 inputs x 2 buffers x 1 MiB blocks ~= 4 MiB; leave headroom,
            # safe on every generation's VMEM.
            vmem_limit_bytes=32 * 1024 * 1024,
        ),
    )(x2, y2)

    total = jnp.sum(partials)                  # tiny (num_blocks * 128) reduce
    if has_tail:
        total = total + tail_sum
    return total * inv_denom


def cape_loss_ref(inp, tgt):
    return jnp.sum(jnp.abs(inp - tgt)) / (inp.shape[0] * BASIS)


if __name__ == "__main__":
    key = jax.random.PRNGKey(0)
    k1, k2 = jax.random.split(key)
    # Small NCHW-shaped inputs, consistent with a regression model's outputs.
    x = jax.random.normal(k1, (2, 4, 16, 16), dtype=jnp.float32)
    t = jax.random.normal(k2, (2, 4, 16, 16), dtype=jnp.float32)

    loss = jax.block_until_ready(cape_loss(x, t))
    ref = jax.block_until_ready(cape_loss_ref(x, t))

    assert jnp.allclose(loss, ref, rtol=1e-5, atol=1e-6), (loss, ref)
    print("KERNEL_OK")
</pallas_src>

<mosaic_0001>
module attributes {stable_mosaic.version = 11 : i64} {
  func.func @_cape_partial_kernel(%arg0: i32, %arg1: memref<16x128xf32, #tpu.memory_space<vmem>>, %arg2: memref<16x128xf32, #tpu.memory_space<vmem>>, %arg3: memref<1x128xf32, #tpu.memory_space<vmem>>) attributes {dimension_semantics = [#tpu.dimension_semantics<parallel>], iteration_bounds = array<i64: 1>, scalar_prefetch = 0 : i64, scratch_operands = 0 : i64, tpu.core_type = #tpu.core_type<tc>, window_params = [{transform_indices = @transform_0, window_bounds = array<i64: 16, 128>}, {transform_indices = @transform_1, window_bounds = array<i64: 16, 128>}, {transform_indices = @transform_2, window_bounds = array<i64: 1, 128>}]} {
    %c0 = arith.constant 0 : index
    %c0_0 = arith.constant 0 : index
    %0 = vector.load %arg1[%c0, %c0_0] : memref<16x128xf32, #tpu.memory_space<vmem>>, vector<16x128xf32>
    %c0_1 = arith.constant 0 : index
    %c0_2 = arith.constant 0 : index
    %1 = vector.load %arg2[%c0_1, %c0_2] : memref<16x128xf32, #tpu.memory_space<vmem>>, vector<16x128xf32>
    %2 = arith.subf %0, %1 : vector<16x128xf32>
    %3 = math.absf %2 : vector<16x128xf32>
    %cst = arith.constant dense<0.000000e+00> : vector<128xf32>
    %4 = vector.multi_reduction <add>, %3, %cst [0] : vector<16x128xf32> to vector<128xf32>
    %5 = vector.shape_cast %4 : vector<128xf32> to vector<1x128xf32>
    %c0_3 = arith.constant 0 : index
    %c0_4 = arith.constant 0 : index
    %6 = vector.load %arg3[%c0_3, %c0_4] : memref<1x128xf32, #tpu.memory_space<vmem>>, vector<1x128xf32>
    tpu.vector_store %arg3[%c0_3, %c0_4], %5 {strides = array<i32>} : memref<1x128xf32, #tpu.memory_space<vmem>>, vector<1x128xf32>,
    return
  }
  func.func @transform_0(%arg0: i32) -> (i32, i32) {
    %c0_i32 = arith.constant 0 : i32
    %c0_i32_0 = arith.constant 0 : i32
    return %arg0, %c0_i32 : i32, i32
  }
  func.func @transform_1(%arg0: i32) -> (i32, i32) {
    %c0_i32 = arith.constant 0 : i32
    %c0_i32_0 = arith.constant 0 : i32
    return %arg0, %c0_i32 : i32, i32
  }
  func.func @transform_2(%arg0: i32) -> (i32, i32) {
    %c0_i32 = arith.constant 0 : i32
    %c0_i32_0 = arith.constant 0 : i32
    return %arg0, %c0_i32 : i32, i32
  }
}

</mosaic_0001>

<llo_original>
// kernel: tpu_custom_call.1
$region0: #{tpu_custom_call.1}
  #allocation0 [shape = 'u32[]', space=smem, size = 0x4, offset = 0x4, fixed_abs, tag = 'smem constant byte address 0x4 - core index']
  #allocation1 [shape = 'u32[144,128]{1,0:T(1,128)}', space=vmem, size = 0x12000, scoped, tag = 'internal scratch']
  %s0 = inlined_call_operand.hbm [shape: f32[16,128], index: 0, kind: input, shape index: {}]
  %s1 = inlined_call_operand.hbm [shape: f32[16,128], index: 1, kind: input, shape index: {}]
  %s2 = inlined_call_operand.hbm [shape: f32[1,128], index: 2, kind: output, shape index: {}]
  %s3 = sld [smem:[#allocation0]]
  $region26: #{tpu_custom_call.1} parent=0
    _
  %s5 = ssub.s32 1, %s3
  %s6 = scalar_select 0, %s5, %s3
  $region1: #{tpu_custom_call.1} parent=0
    #allocation2 [shape = 'u8[8192]{0}', space=vmem, size = 0x2000, scoped, tag = 'input window, operand 0, single buffered']
    #allocation3 [shape = 's32[1]{0}', space=sflag, size = 0x4, scoped, tag = 'scoped memory for tpu_custom_call.1']
    #allocation4 [shape = 's32[1]{0}', space=sflag, size = 0x4, scoped, tag = 'scoped memory for tpu_custom_call.1']
    #allocation5 [shape = 'u8[8192]{0}', space=vmem, size = 0x2000, scoped, tag = 'input window, operand 1, single buffered']
    #allocation6 [shape = 's32[1]{0}', space=sflag, size = 0x4, scoped, tag = 'scoped memory for tpu_custom_call.1']
    #allocation7 [shape = 'u8[512]{0}', space=vmem, size = 0x400, scoped, tag = 'output window, operand 0, single buffered']
    %7 = vsyncpa [#allocation3], 0
    %8 = vsyncpa [#allocation6], 0
    %9 = vsyncpa [#allocation4], 0
    // Predicated region
    $region2: #{tpu_custom_call.1} parent=1 // pred_check
      _
    $region3: #{tpu_custom_call.1} parent=1 // pred_check_branch
      %11 = sbr.rel (0) target = $region5
    $region4: #{tpu_custom_call.1} parent=1 // pred_region
      %s13 = ssub.s32 256, 256
      %14 = vsyncadd [#allocation3], %s13
      %s15 = sshll.u32 [#allocation2], 4
      %s16 = int_to_ptr.vmem [resolvable:$true] %s15
      %21 = dma.hbm_to_vmem [thread:$0]  %s0, 256, %s16, [#allocation3], 128, 128, 8
    $region5: #{tpu_custom_call.1} parent=1 // pred_fallthru
      _
    // Predicated region
    $region6: #{tpu_custom_call.1} parent=1 // pred_check
      _
    $region7: #{tpu_custom_call.1} parent=1 // pred_check_branch
      %23 = sbr.rel (0) target = $region9
    $region8: #{tpu_custom_call.1} parent=1 // pred_region
      %s25 = ssub.s32 256, 256
      %26 = vsyncadd [#allocation6], %s25
      %s27 = sshll.u32 [#allocation5], 4
      %s28 = int_to_ptr.vmem [resolvable:$true] %s27
      %33 = dma.hbm_to_vmem [thread:$0]  %s1, 256, %s28, [#allocation6], 128, 128, 8
    $region9: #{tpu_custom_call.1} parent=1 // pred_fallthru
      _
    // Predicated region
    $region10: #{tpu_custom_call.1} parent=1 // pred_check
      _
    $region11: #{tpu_custom_call.1} parent=1 // pred_check_branch
      %35 = sbr.rel (0) target = $region13
    $region12: #{tpu_custom_call.1} parent=1 // pred_region
      %36 = dma.done [#allocation3], 256
    $region13: #{tpu_custom_call.1} parent=1 // pred_fallthru
      _
    // Predicated region
    $region14: #{tpu_custom_call.1} parent=1 // pred_check
      _
    $region15: #{tpu_custom_call.1} parent=1 // pred_check_branch
      %38 = sbr.rel (0) target = $region17
    $region16: #{tpu_custom_call.1} parent=1 // pred_region
      %39 = dma.done [#allocation6], 256
    $region17: #{tpu_custom_call.1} parent=1 // pred_fallthru
      _
    %v40 = vld [vmem:[#allocation2] sm:$0xff]
    %v41 = vld [vmem:[#allocation2 + $0x8] sm:$0xff]
    %v42 = vld [vmem:[#allocation5] sm:$0xff]
    %v43 = vld [vmem:[#allocation5 + $0x8] sm:$0xff]
    %v44 = vsub.f32 %v40, %v42
    %v45 = vsub.f32 %v41, %v43
    %v46 = vand.u32 2147483647, %v44
    %v47 = vand.u32 2147483647, %v45
    %v48 = vadd.f32 %v46, %v47
    %v49 = vrot.slane %v48, 4
    %v50 = vadd.f32 %v48, %v49
    %v51 = vrot.slane %v50, 2
    %v52 = vadd.f32 %v50, %v51
    %v53 = vrot.slane %v52, 1
    %v54 = vadd.f32 %v52, %v53
    %55 = vst [vmem:[#allocation7] sm:$0x1] %v54
    // Predicated region
    $region18: #{tpu_custom_call.1} parent=1 // pred_check
      _
    $region19: #{tpu_custom_call.1} parent=1 // pred_check_branch
      %57 = sbr.rel (0) target = $region21
    $region20: #{tpu_custom_call.1} parent=1 // pred_region
      %s59 = ssub.s32 16, 16
      %60 = vsyncadd [#allocation4], %s59
      %s62 = sshll.u32 [#allocation7], 4
      %s63 = int_to_ptr.vmem [resolvable:$true] %s62
      %65 = dma.vmem_to_hbm [thread:$0]  %s63, 16, %s2, [#allocation4]
    $region21: #{tpu_custom_call.1} parent=1 // pred_fallthru
      _
    // Predicated region
    $region22: #{tpu_custom_call.1} parent=1 // pred_check
      _
    $region23: #{tpu_custom_call.1} parent=1 // pred_check_branch
      %67 = sbr.rel (0) target = $region25
    $region24: #{tpu_custom_call.1} parent=1 // pred_region
      %68 = dma.done [#allocation4], 16
    $region25: #{tpu_custom_call.1} parent=1 // pred_fallthru
      _
    %69 = vsyncpa [#allocation3], 1
    %70 = vsyncpa [#allocation6], 1
    %71 = vsyncpa [#allocation4], 1

</llo_original>
